<compile_context>
chip_gen: v5e
topology: v5e:2x2
jax: 0.10.0
libtpu: 0.0.40
codegen_flags: <defaults>
</compile_context>

<pallas_src>
import jax
import jax.numpy as jnp
from jax.experimental import pallas as pl
from jax.experimental.pallas import tpu as pltpu

# "configs" values (synthetic, small):
TEXT_DIM = 256
RDC_TEXT_DIM = 32
Z_DIM = 16
H_DIM = 64
X_DIM = 128
BATCH = 24          # small test batch; kernel scales to large B via TILE_B


def _round_up(x, m):
    return ((x + m - 1) // m) * m


def _netg_kernel(z_ref, c_ref,
                 w1_z_ref, w_fold_ref, b_fold_ref,
                 w2_ref, b2_ref,
                 out_ref):
    # Cast streamed activations to bf16 inside the kernel (MXU inputs),
    # accumulate in f32 via preferred_element_type.
    zb = z_ref[...].astype(jnp.bfloat16)
    cb = c_ref[...].astype(jnp.bfloat16)

    # First main Linear with the rdc layer folded in:
    #   h = z @ W1_z + c @ (W_rdc @ W1_t) + (b_rdc @ W1_t + b1)
    h = (jnp.dot(zb, w1_z_ref[...], preferred_element_type=jnp.float32)
         + jnp.dot(cb, w_fold_ref[...], preferred_element_type=jnp.float32)
         + b_fold_ref[...])

    # LeakyReLU (PyTorch default negative_slope = 0.01), in f32
    h = jnp.where(h > 0, h, 0.01 * h)

    # Second main Linear + Tanh (f32 accumulate / activation, bf16 store)
    o = jnp.dot(h.astype(jnp.bfloat16), w2_ref[...],
                preferred_element_type=jnp.float32) + b2_ref[...]
    out_ref[...] = jnp.tanh(o).astype(out_ref.dtype)


def netg_forward(z, c, params, tile_b=1024):
    """z: [B, Z_DIM], c: [B, TEXT_DIM] (any float dtype) -> [B, X_DIM] bf16."""
    w1_z, w_fold, b_fold, w2, b2 = params
    batch = z.shape[0]

    # Batch tile: multiple of 16 (bf16 sublane packing), capped so there are
    # >=2 grid steps whenever possible (feeds both TensorCores on v7x).
    tile_b = max(16, min(_round_up(tile_b, 16),
                         _round_up(pl.cdiv(batch, 2), 16)))
    grid = (pl.cdiv(batch, tile_b),)

    batch_spec = lambda feat: pl.BlockSpec((tile_b, feat), lambda i: (i, 0))
    # Weights / biases: same block every grid step -> VMEM-resident.
    resident = lambda shape: pl.BlockSpec(shape, lambda i: (0, 0))

    out = pl.pallas_call(
        _netg_kernel,
        out_shape=jax.ShapeDtypeStruct((batch, X_DIM), jnp.bfloat16),
        grid=grid,
        in_specs=[
            batch_spec(Z_DIM), batch_spec(TEXT_DIM),
            resident(w1_z.shape), resident(w_fold.shape), resident(b_fold.shape),
            resident(w2.shape), resident(b2.shape),
        ],
        out_specs=pl.BlockSpec((tile_b, X_DIM), lambda i: (i, 0)),
        compiler_params=pltpu.CompilerParams(
            dimension_semantics=("parallel",)),
    )(z, c, w1_z, w_fold, b_fold, w2, b2)

    return out


def init_raw_params(key):
    """Parameters in the original PyTorch layout, f32, [in_features, out_features]."""
    ks = jax.random.split(key, 7)
    scale = 0.05
    w_rdc = scale * jax.random.normal(ks[0], (TEXT_DIM, RDC_TEXT_DIM), jnp.float32)
    b_rdc = scale * jax.random.normal(ks[1], (1, RDC_TEXT_DIM), jnp.float32)
    w1_z = scale * jax.random.normal(ks[2], (Z_DIM, H_DIM), jnp.float32)
    w1_t = scale * jax.random.normal(ks[3], (RDC_TEXT_DIM, H_DIM), jnp.float32)
    b1 = scale * jax.random.normal(ks[4], (1, H_DIM), jnp.float32)
    w2 = scale * jax.random.normal(ks[5], (H_DIM, X_DIM), jnp.float32)
    b2 = scale * jax.random.normal(ks[6], (1, X_DIM), jnp.float32)
    return (w_rdc, b_rdc, w1_z, w1_t, b1, w2, b2)


def fold_params(raw_params):
    """One-time prep: fold the rdc linear into the first main linear (exact in f32),
    then cast matmul weights to bf16 for the MXU; biases stay f32."""
    w_rdc, b_rdc, w1_z, w1_t, b1, w2, b2 = raw_params
    w_fold = jnp.dot(w_rdc, w1_t)                 # [TEXT_DIM, H_DIM], f32 fold
    b_fold = jnp.dot(b_rdc, w1_t) + b1            # [1, H_DIM], f32
    return (w1_z.astype(jnp.bfloat16),
            w_fold.astype(jnp.bfloat16),
            b_fold,
            w2.astype(jnp.bfloat16),
            b2)


def netg_reference(z, c, params):
    """Pure-JAX reference mirroring the kernel's bf16-matmul / f32-accumulate math."""
    w1_z, w_fold, b_fold, w2, b2 = params
    zb = z.astype(jnp.bfloat16)
    cb = c.astype(jnp.bfloat16)
    h = (jnp.dot(zb, w1_z, preferred_element_type=jnp.float32)
         + jnp.dot(cb, w_fold, preferred_element_type=jnp.float32)
         + b_fold)
    h = jnp.where(h > 0, h, 0.01 * h)
    o = jnp.dot(h.astype(jnp.bfloat16), w2, preferred_element_type=jnp.float32) + b2
    return jnp.tanh(o)


if __name__ == "__main__":
    key = jax.random.PRNGKey(0)
    k_z, k_c, k_p = jax.random.split(key, 3)

    z = jax.random.normal(k_z, (BATCH, Z_DIM), jnp.float32)
    c = jax.random.normal(k_c, (BATCH, TEXT_DIM), jnp.float32)
    params = fold_params(init_raw_params(k_p))

    # With BATCH=24 the tile cap picks tile_b=16 -> 2 grid steps (partial last
    # block), exercising the multi-step / VMEM-resident-weight path.
    out = netg_forward(z, c, params)
    out = jax.block_until_ready(out)

    ref = netg_reference(z, c, params)
    assert out.shape == (BATCH, X_DIM), out.shape
    assert out.dtype == jnp.bfloat16, out.dtype
    err = float(jnp.max(jnp.abs(out.astype(jnp.float32) - ref)))
    assert err < 1e-2, err

    print("KERNEL_OK")
</pallas_src>

<mosaic_0001>
module attributes {stable_mosaic.version = 11 : i64} {
  func.func @_netg_kernel(%arg0: i32, %arg1: memref<16x16xf32, #tpu.memory_space<vmem>>, %arg2: memref<16x256xf32, #tpu.memory_space<vmem>>, %arg3: memref<16x64xbf16, #tpu.memory_space<vmem>>, %arg4: memref<256x64xbf16, #tpu.memory_space<vmem>>, %arg5: memref<1x64xf32, #tpu.memory_space<vmem>>, %arg6: memref<64x128xbf16, #tpu.memory_space<vmem>>, %arg7: memref<1x128xf32, #tpu.memory_space<vmem>>, %arg8: memref<16x128xbf16, #tpu.memory_space<vmem>>) attributes {dimension_semantics = [#tpu.dimension_semantics<parallel>], iteration_bounds = array<i64: 2>, scalar_prefetch = 0 : i64, scratch_operands = 0 : i64, tpu.core_type = #tpu.core_type<tc>, window_params = [{transform_indices = @transform_0, window_bounds = array<i64: 16, 16>}, {transform_indices = @transform_1, window_bounds = array<i64: 16, 256>}, {pipeline_mode = #tpu.pipeline_mode<synchronous>, transform_indices = @transform_2, window_bounds = array<i64: 16, 64>}, {pipeline_mode = #tpu.pipeline_mode<synchronous>, transform_indices = @transform_3, window_bounds = array<i64: 256, 64>}, {pipeline_mode = #tpu.pipeline_mode<synchronous>, transform_indices = @transform_4, window_bounds = array<i64: 1, 64>}, {pipeline_mode = #tpu.pipeline_mode<synchronous>, transform_indices = @transform_5, window_bounds = array<i64: 64, 128>}, {pipeline_mode = #tpu.pipeline_mode<synchronous>, transform_indices = @transform_6, window_bounds = array<i64: 1, 128>}, {transform_indices = @transform_7, window_bounds = array<i64: 16, 128>}]} {
    %c0 = arith.constant 0 : index
    %c0_0 = arith.constant 0 : index
    %0 = vector.load %arg1[%c0, %c0_0] : memref<16x16xf32, #tpu.memory_space<vmem>>, vector<16x16xf32>
    %1 = arith.truncf %0 : vector<16x16xf32> to vector<16x16xbf16>
    %c0_1 = arith.constant 0 : index
    %c0_2 = arith.constant 0 : index
    %2 = vector.load %arg2[%c0_1, %c0_2] : memref<16x256xf32, #tpu.memory_space<vmem>>, vector<16x256xf32>
    %3 = arith.truncf %2 : vector<16x256xf32> to vector<16x256xbf16>
    %c0_3 = arith.constant 0 : index
    %c0_4 = arith.constant 0 : index
    %4 = vector.load %arg3[%c0_3, %c0_4] : memref<16x64xbf16, #tpu.memory_space<vmem>>, vector<16x64xbf16>
    %cst = arith.constant dense<0.000000e+00> : vector<16x64xf32>
    %5 = tpu.matmul %1, %4, %cst {dimension_numbers = #tpu.dot_dimension_numbers<[1], [0], [0], [1], [0, 0, 1, 1], [], []>} : vector<16x16xbf16>, vector<16x64xbf16>, vector<16x64xf32> -> vector<16x64xf32>
    %c0_5 = arith.constant 0 : index
    %c0_6 = arith.constant 0 : index
    %6 = vector.load %arg4[%c0_5, %c0_6] : memref<256x64xbf16, #tpu.memory_space<vmem>>, vector<256x64xbf16>
    %cst_7 = arith.constant dense<0.000000e+00> : vector<16x64xf32>
    %7 = tpu.matmul %3, %6, %cst_7 {dimension_numbers = #tpu.dot_dimension_numbers<[1], [0], [0], [1], [0, 0, 1, 1], [], []>} : vector<16x256xbf16>, vector<256x64xbf16>, vector<16x64xf32> -> vector<16x64xf32>
    %8 = arith.addf %5, %7 : vector<16x64xf32>
    %c0_8 = arith.constant 0 : index
    %c0_9 = arith.constant 0 : index
    %9 = vector.load %arg5[%c0_8, %c0_9] : memref<1x64xf32, #tpu.memory_space<vmem>>, vector<1x64xf32>
    %10 = vector.broadcast %9 : vector<1x64xf32> to vector<16x64xf32>
    %11 = arith.addf %8, %10 : vector<16x64xf32>
    %cst_10 = arith.constant 0.000000e+00 : f32
    %12 = vector.broadcast %cst_10 : f32 to vector<16x64xf32>
    %13 = arith.cmpf ogt, %11, %12 : vector<16x64xf32>
    %cst_11 = arith.constant 0.00999999977 : f32
    %14 = vector.broadcast %cst_11 : f32 to vector<16x64xf32>
    %15 = arith.mulf %14, %11 : vector<16x64xf32>
    %16 = arith.select %13, %11, %15 : vector<16x64xi1>, vector<16x64xf32>
    %17 = arith.truncf %16 : vector<16x64xf32> to vector<16x64xbf16>
    %c0_12 = arith.constant 0 : index
    %c0_13 = arith.constant 0 : index
    %18 = vector.load %arg6[%c0_12, %c0_13] : memref<64x128xbf16, #tpu.memory_space<vmem>>, vector<64x128xbf16>
    %cst_14 = arith.constant dense<0.000000e+00> : vector<16x128xf32>
    %19 = tpu.matmul %17, %18, %cst_14 {dimension_numbers = #tpu.dot_dimension_numbers<[1], [0], [0], [1], [0, 0, 1, 1], [], []>} : vector<16x64xbf16>, vector<64x128xbf16>, vector<16x128xf32> -> vector<16x128xf32>
    %c0_15 = arith.constant 0 : index
    %c0_16 = arith.constant 0 : index
    %20 = vector.load %arg7[%c0_15, %c0_16] : memref<1x128xf32, #tpu.memory_space<vmem>>, vector<1x128xf32>
    %21 = vector.broadcast %20 : vector<1x128xf32> to vector<16x128xf32>
    %22 = arith.addf %19, %21 : vector<16x128xf32>
    %23 = math.tanh %22 : vector<16x128xf32>
    %24 = arith.truncf %23 : vector<16x128xf32> to vector<16x128xbf16>
    %c0_17 = arith.constant 0 : index
    %c0_18 = arith.constant 0 : index
    %25 = vector.load %arg8[%c0_17, %c0_18] : memref<16x128xbf16, #tpu.memory_space<vmem>>, vector<16x128xbf16>
    tpu.vector_store %arg8[%c0_17, %c0_18], %24 {strides = array<i32>} : memref<16x128xbf16, #tpu.memory_space<vmem>>, vector<16x128xbf16>,
    return
  }
  func.func @transform_0(%arg0: i32) -> (i32, i32) {
    %c0_i32 = arith.constant 0 : i32
    %c0_i32_0 = arith.constant 0 : i32
    return %arg0, %c0_i32 : i32, i32
  }
  func.func @transform_1(%arg0: i32) -> (i32, i32) {
    %c0_i32 = arith.constant 0 : i32
    %c0_i32_0 = arith.constant 0 : i32
    return %arg0, %c0_i32 : i32, i32
  }
  func.func @transform_2(%arg0: i32) -> (i32, i32) {
    %c0_i32 = arith.constant 0 : i32
    %c0_i32_0 = arith.constant 0 : i32
    %c0_i32_1 = arith.constant 0 : i32
    return %c0_i32, %c0_i32_0 : i32, i32
  }
  func.func @transform_3(%arg0: i32) -> (i32, i32) {
    %c0_i32 = arith.constant 0 : i32
    %c0_i32_0 = arith.constant 0 : i32
    %c0_i32_1 = arith.constant 0 : i32
    return %c0_i32, %c0_i32_0 : i32, i32
  }
  func.func @transform_4(%arg0: i32) -> (i32, i32) {
    %c0_i32 = arith.constant 0 : i32
    %c0_i32_0 = arith.constant 0 : i32
    %c0_i32_1 = arith.constant 0 : i32
    return %c0_i32, %c0_i32_0 : i32, i32
  }
  func.func @transform_5(%arg0: i32) -> (i32, i32) {
    %c0_i32 = arith.constant 0 : i32
    %c0_i32_0 = arith.constant 0 : i32
    %c0_i32_1 = arith.constant 0 : i32
    return %c0_i32, %c0_i32_0 : i32, i32
  }
  func.func @transform_6(%arg0: i32) -> (i32, i32) {
    %c0_i32 = arith.constant 0 : i32
    %c0_i32_0 = arith.constant 0 : i32
    %c0_i32_1 = arith.constant 0 : i32
    return %c0_i32, %c0_i32_0 : i32, i32
  }
  func.func @transform_7(%arg0: i32) -> (i32, i32) {
    %c0_i32 = arith.constant 0 : i32
    %c0_i32_0 = arith.constant 0 : i32
    return %arg0, %c0_i32 : i32, i32
  }
}

</mosaic_0001>

<llo_original>
// kernel: tpu_custom_call.1
$region0: #{tpu_custom_call.1}
  #allocation0 [shape = 'u32[]', space=smem, size = 0x4, offset = 0x4, fixed_abs, tag = 'smem constant byte address 0x4 - core index']
  #allocation1 [shape = 'u32[72,128]{1,0:T(1,128)}', space=vmem, size = 0x9000, scoped, tag = 'internal scratch']
  %s0 = inlined_call_operand.vmem [shape: f32[24,16], index: 0, kind: input, shape index: {}]
  %s1 = inlined_call_operand.vmem [shape: f32[24,256], index: 1, kind: input, shape index: {}]
  %s2 = inlined_call_operand.vmem [shape: bf16[16,64], index: 2, kind: input, shape index: {}]
  %s3 = inlined_call_operand.vmem [shape: bf16[256,64], index: 3, kind: input, shape index: {}]
  %s4 = inlined_call_operand.vmem [shape: f32[1,64], index: 4, kind: input, shape index: {}]
  %s5 = inlined_call_operand.vmem [shape: bf16[64,128], index: 5, kind: input, shape index: {}]
  %s6 = inlined_call_operand.vmem [shape: f32[1,128], index: 6, kind: input, shape index: {}]
  %s7 = inlined_call_operand.hbm [shape: bf16[24,128], index: 7, kind: output, shape index: {}]
  %s8 = sld [smem:[#allocation0]]
  $region61: #{tpu_custom_call.1} parent=0
    _
  %s10 = ssub.s32 1, %s8
  %s11 = scalar_select 0, %s10, %s8
  $region1: #{tpu_custom_call.1} parent=0
    #allocation2 [shape = 'u8[8192]{0}', space=vmem, size = 0x2000, scoped, tag = 'output window, operand 0']
    #allocation3 [shape = 's32[2]{0}', space=sflag, size = 0x8, scoped, tag = 'scoped memory for tpu_custom_call.1']
    %12 = vsyncpa [#allocation3], 0
    %s13 = scalar_lea.sflag [#allocation3], 1
    %14 = vsyncpa %s13, 0
    loop: start=0, step=1, limit=4
    $region2: #{tpu_custom_call.1} parent=1 // loop_pre_header
      _
    $region3: #{tpu_custom_call.1} parent=1 // loop_header
      %s16 = sphi 0, %s20
      %p17 = scmp.ge.s32.totalorder %s16, 4
      %s26 = sphi 0, %s28
      %s29 = sphi 0, %s26
      %s30 = sphi 0, %s29
      %s46 = sphi 0, %s30
      %s52 = sphi 0, %s54
      %s55 = sphi 0, %s52
      %s56 = sphi 0, %s55
      %s72 = sphi 0, %s56
      %s76 = sphi 0, %s76
      %s78 = sphi 0, %s76
      %s79 = sphi 0, %s78
      %s93 = sphi 0, %s79
      %s97 = sphi 0, %s97
      %s99 = sphi 0, %s97
      %s100 = sphi 0, %s99
      %s114 = sphi 0, %s100
      %s118 = sphi 0, %s118
      %s120 = sphi 0, %s118
      %s121 = sphi 0, %s120
      %s135 = sphi 0, %s121
      %s139 = sphi 0, %s139
      %s141 = sphi 0, %s139
      %s142 = sphi 0, %s141
      %s156 = sphi 0, %s142
      %s160 = sphi 0, %s160
      %s162 = sphi 0, %s160
      %s163 = sphi 0, %s162
      %s177 = sphi 0, %s163
      %s183 = sphi 0, %s185
      %s186 = sphi 0, %s183
      %s187 = sphi 0, %s186
      %s203 = sphi 0, %s187
    $region4: #{tpu_custom_call.1} parent=1 // loop_header_branch
      %19 = sbr.rel (%p17) target = $region8
    $region5: #{tpu_custom_call.1} parent=1 // loop_body
      %s21 = ssub.s32 %s16, 1
      %s22 = ssub.s32 %s16, 2
      %s23 = sadd.s32 %s16, 1
      %s24 = ssub.s32 %s16, %s23
      %p25 = scmp.eq.s32.totalorder %s24, 0
      %s27 = sadd.s32 %s26, 1
      %s28 = scalar_select %p25, %s26, %s27
      %p31 = pneg %p25
      %p32 = scmp.eq.s32.totalorder %s16, 1
      %p33 = por %p31, %p32
      %p34 = scmp.ne.s32.totalorder %s26, %s29
      %p35 = scmp.eq.s32.totalorder %s16, 0
      %p36 = por %p34, %p35
      %p37 = scmp.ne.s32.totalorder %s26, %s29
      %p38 = scmp.eq.s32.totalorder %s21, 1
      %p39 = por %p37, %p38
      %p40 = scmp.ne.s32.totalorder %s29, %s30
      %p41 = scmp.eq.s32.totalorder %s21, 0
      %p42 = por %p40, %p41
      %p43 = scmp.ne.s32.totalorder %s29, %s30
      %p44 = scmp.eq.s32.totalorder %s22, 1
      %p45 = por %p43, %p44
      %p47 = scmp.ne.s32.totalorder %s30, %s46
      %p48 = scmp.eq.s32.totalorder %s22, 0
      %p49 = por %p47, %p48
      %s50 = ssub.s32 %s16, %s23
      %p51 = scmp.eq.s32.totalorder %s50, 0
      %s53 = sadd.s32 %s52, 1
      %s54 = scalar_select %p51, %s52, %s53
      %p57 = pneg %p51
      %p58 = scmp.eq.s32.totalorder %s16, 1
      %p59 = por %p57, %p58
      %p60 = scmp.ne.s32.totalorder %s52, %s55
      %p61 = scmp.eq.s32.totalorder %s16, 0
      %p62 = por %p60, %p61
      %p63 = scmp.ne.s32.totalorder %s52, %s55
      %p64 = scmp.eq.s32.totalorder %s21, 1
      %p65 = por %p63, %p64
      %p66 = scmp.ne.s32.totalorder %s55, %s56
      %p67 = scmp.eq.s32.totalorder %s21, 0
      %p68 = por %p66, %p67
      %p69 = scmp.ne.s32.totalorder %s55, %s56
      %p70 = scmp.eq.s32.totalorder %s22, 1
      %p71 = por %p69, %p70
      %p73 = scmp.ne.s32.totalorder %s56, %s72
      %p74 = scmp.eq.s32.totalorder %s22, 0
      %p75 = por %p73, %p74
      %s77 = sadd.s32 %s76, 1
      %p80 = scmp.eq.s32.totalorder %s16, 1
      %p81 = scmp.ne.s32.totalorder %s76, %s78
      %p82 = scmp.eq.s32.totalorder %s16, 0
      %p83 = por %p81, %p82
      %p84 = scmp.ne.s32.totalorder %s76, %s78
      %p85 = scmp.eq.s32.totalorder %s21, 1
      %p86 = por %p84, %p85
      %p87 = scmp.ne.s32.totalorder %s78, %s79
      %p88 = scmp.eq.s32.totalorder %s21, 0
      %p89 = por %p87, %p88
      %p90 = scmp.ne.s32.totalorder %s78, %s79
      %p91 = scmp.eq.s32.totalorder %s22, 1
      %p92 = por %p90, %p91
      %p94 = scmp.ne.s32.totalorder %s79, %s93
      %p95 = scmp.eq.s32.totalorder %s22, 0
      %p96 = por %p94, %p95
      %s98 = sadd.s32 %s97, 1
      %p101 = scmp.eq.s32.totalorder %s16, 1
      %p102 = scmp.ne.s32.totalorder %s97, %s99
      %p103 = scmp.eq.s32.totalorder %s16, 0
      %p104 = por %p102, %p103
      %p105 = scmp.ne.s32.totalorder %s97, %s99
      %p106 = scmp.eq.s32.totalorder %s21, 1
      %p107 = por %p105, %p106
      %p108 = scmp.ne.s32.totalorder %s99, %s100
      %p109 = scmp.eq.s32.totalorder %s21, 0
      %p110 = por %p108, %p109
      %p111 = scmp.ne.s32.totalorder %s99, %s100
      %p112 = scmp.eq.s32.totalorder %s22, 1
      %p113 = por %p111, %p112
      %p115 = scmp.ne.s32.totalorder %s100, %s114
      %p116 = scmp.eq.s32.totalorder %s22, 0
      %p117 = por %p115, %p116
      %s119 = sadd.s32 %s118, 1
      %p122 = scmp.eq.s32.totalorder %s16, 1
      %p123 = scmp.ne.s32.totalorder %s118, %s120
      %p124 = scmp.eq.s32.totalorder %s16, 0
      %p125 = por %p123, %p124
      %p126 = scmp.ne.s32.totalorder %s118, %s120
      %p127 = scmp.eq.s32.totalorder %s21, 1
      %p128 = por %p126, %p127
      %p129 = scmp.ne.s32.totalorder %s120, %s121
      %p130 = scmp.eq.s32.totalorder %s21, 0
      %p131 = por %p129, %p130
      %p132 = scmp.ne.s32.totalorder %s120, %s121
      %p133 = scmp.eq.s32.totalorder %s22, 1
      %p134 = por %p132, %p133
      %p136 = scmp.ne.s32.totalorder %s121, %s135
      %p137 = scmp.eq.s32.totalorder %s22, 0
      %p138 = por %p136, %p137
      %s140 = sadd.s32 %s139, 1
      %p143 = scmp.eq.s32.totalorder %s16, 1
      %p144 = scmp.ne.s32.totalorder %s139, %s141
      %p145 = scmp.eq.s32.totalorder %s16, 0
      %p146 = por %p144, %p145
      %p147 = scmp.ne.s32.totalorder %s139, %s141
      %p148 = scmp.eq.s32.totalorder %s21, 1
      %p149 = por %p147, %p148
      %p150 = scmp.ne.s32.totalorder %s141, %s142
      %p151 = scmp.eq.s32.totalorder %s21, 0
      %p152 = por %p150, %p151
      %p153 = scmp.ne.s32.totalorder %s141, %s142
      %p154 = scmp.eq.s32.totalorder %s22, 1
      %p155 = por %p153, %p154
      %p157 = scmp.ne.s32.totalorder %s142, %s156
      %p158 = scmp.eq.s32.totalorder %s22, 0
      %p159 = por %p157, %p158
      %s161 = sadd.s32 %s160, 1
      %p164 = scmp.eq.s32.totalorder %s16, 1
      %p165 = scmp.ne.s32.totalorder %s160, %s162
      %p166 = scmp.eq.s32.totalorder %s16, 0
      %p167 = por %p165, %p166
      %p168 = scmp.ne.s32.totalorder %s160, %s162
      %p169 = scmp.eq.s32.totalorder %s21, 1
      %p170 = por %p168, %p169
      %p171 = scmp.ne.s32.totalorder %s162, %s163
      %p172 = scmp.eq.s32.totalorder %s21, 0
      %p173 = por %p171, %p172
      %p174 = scmp.ne.s32.totalorder %s162, %s163
      %p175 = scmp.eq.s32.totalorder %s22, 1
      %p176 = por %p174, %p175
      %p178 = scmp.ne.s32.totalorder %s163, %s177
      %p179 = scmp.eq.s32.totalorder %s22, 0
      %p180 = por %p178, %p179
      %s181 = ssub.s32 %s16, %s23
      %p182 = scmp.eq.s32.totalorder %s181, 0
      %s184 = sadd.s32 %s183, 1
      %s185 = scalar_select %p182, %s183, %s184
      %p188 = pneg %p182
      %p189 = scmp.eq.s32.totalorder %s16, 1
      %p190 = por %p188, %p189
      %p191 = scmp.ne.s32.totalorder %s183, %s186
      %p192 = scmp.eq.s32.totalorder %s16, 0
      %p193 = por %p191, %p192
      %p194 = scmp.ne.s32.totalorder %s183, %s186
      %p195 = scmp.eq.s32.totalorder %s21, 1
      %p196 = por %p194, %p195
      %p197 = scmp.ne.s32.totalorder %s186, %s187
      %p198 = scmp.eq.s32.totalorder %s21, 0
      %p199 = por %p197, %p198
      %p200 = scmp.ne.s32.totalorder %s186, %s187
      %p201 = scmp.eq.s32.totalorder %s22, 1
      %p202 = por %p200, %p201
      %p204 = scmp.ne.s32.totalorder %s187, %s203
      %p205 = scmp.eq.s32.totalorder %s22, 0
      %p206 = por %p204, %p205
      %p207 = scmp.le.s32.totalorder 1, %s16
      %p208 = scmp.lt.s32.totalorder %s16, 3
      %p209 = pnand %p207, %p208
      %p210 = pneg %p209
      // Predicated region
      $region9: #{tpu_custom_call.1} parent=5 // pred_check
        _
      $region10: #{tpu_custom_call.1} parent=5 // pred_check_branch
        %212 = sbr.rel (%p209) target = $region12
      $region11: #{tpu_custom_call.1} parent=5 // pred_region
        %s213 = ssub.s32 %s16, 1
        // Predicated region
        $region13: #{tpu_custom_call.1} parent=11 // pred_check
          %p214 = pneg %p89
        $region14: #{tpu_custom_call.1} parent=11 // pred_check_branch
          %216 = sbr.rel (%p214) target = $region16
        $region15: #{tpu_custom_call.1} parent=11 // pred_region
          _
        $region16: #{tpu_custom_call.1} parent=11 // pred_fallthru
          _
        // Predicated region
        $region17: #{tpu_custom_call.1} parent=11 // pred_check
          %p217 = pneg %p110
        $region18: #{tpu_custom_call.1} parent=11 // pred_check_branch
          %219 = sbr.rel (%p217) target = $region20
        $region19: #{tpu_custom_call.1} parent=11 // pred_region
          _
        $region20: #{tpu_custom_call.1} parent=11 // pred_fallthru
          _
        // Predicated region
        $region21: #{tpu_custom_call.1} parent=11 // pred_check
          %p220 = pneg %p131
        $region22: #{tpu_custom_call.1} parent=11 // pred_check_branch
          %222 = sbr.rel (%p220) target = $region24
        $region23: #{tpu_custom_call.1} parent=11 // pred_region
          _
        $region24: #{tpu_custom_call.1} parent=11 // pred_fallthru
          _
        // Predicated region
        $region25: #{tpu_custom_call.1} parent=11 // pred_check
          %p223 = pneg %p152
        $region26: #{tpu_custom_call.1} parent=11 // pred_check_branch
          %225 = sbr.rel (%p223) target = $region28
        $region27: #{tpu_custom_call.1} parent=11 // pred_region
          _
        $region28: #{tpu_custom_call.1} parent=11 // pred_fallthru
          _
        // Predicated region
        $region29: #{tpu_custom_call.1} parent=11 // pred_check
          %p226 = pneg %p173
        $region30: #{tpu_custom_call.1} parent=11 // pred_check_branch
          %228 = sbr.rel (%p226) target = $region32
        $region31: #{tpu_custom_call.1} parent=11 // pred_region
          _
        $region32: #{tpu_custom_call.1} parent=11 // pred_fallthru
          _
      $region12: #{tpu_custom_call.1} parent=5 // pred_fallthru
        _
      %p229 = scmp.lt.s32.totalorder %s16, 2
      // Predicated region
      $region33: #{tpu_custom_call.1} parent=5 // pred_check
        %p230 = pneg %p229
      $region34: #{tpu_custom_call.1} parent=5 // pred_check_branch
        %232 = sbr.rel (%p230) target = $region36
      $region35: #{tpu_custom_call.1} parent=5 // pred_region
        // Predicated region
        $region37: #{tpu_custom_call.1} parent=35 // pred_check
          %p233 = pneg %p36
        $region38: #{tpu_custom_call.1} parent=35 // pred_check_branch
          %235 = sbr.rel (%p233) target = $region40
        $region39: #{tpu_custom_call.1} parent=35 // pred_region
          %s236 = smul.u32 2, %s16
          %s237 = ssub.s32 3, %s236
          %p238 = scmp.lt.s32.totalorder %s237, 2
          %s239 = scalar_select %p238, %s237, 2
          %s240 = smul.u32 8, %s239
          %p241 = scmp.lt.s32.totalorder %s236, 2
          %s242 = scalar_select %p241, %s236, 2
          %s243 = smul.addr %s242, 8
          %s244 = scalar_lea.vmem %s0, %s243
          %s245 = smul.u32 2, %s16
          %s246 = ssub.s32 3, %s245
          %p247 = scmp.lt.s32.totalorder %s246, 2
          %s248 = scalar_select %p247, %s246, 2
          %s249 = smul.u32 8, %s248
        $region40: #{tpu_custom_call.1} parent=35 // pred_fallthru
          _
        // Predicated region
        $region41: #{tpu_custom_call.1} parent=35 // pred_check
          %p250 = pneg %p62
        $region42: #{tpu_custom_call.1} parent=35 // pred_check_branch
          %252 = sbr.rel (%p250) target = $region44
        $region43: #{tpu_custom_call.1} parent=35 // pred_region
          %s253 = smul.u32 2, %s16
          %s254 = ssub.s32 3, %s253
          %p255 = scmp.lt.s32.totalorder %s254, 2
          %s256 = scalar_select %p255, %s254, 2
          %s257 = smul.u32 8, %s256
          %s258 = smul.u32 %s257, 2
          %p259 = scmp.lt.s32.totalorder %s253, 2
          %s260 = scalar_select %p259, %s253, 2
          %s261 = smul.addr %s260, 2
          %s262 = smul.addr %s261, 8
          %s263 = scalar_lea.vmem %s1, %s262
          %s264 = smul.u32 2, %s16
          %s265 = ssub.s32 3, %s264
          %p266 = scmp.lt.s32.totalorder %s265, 2
          %s267 = scalar_select %p266, %s265, 2
          %s268 = smul.u32 8, %s267
          %s269 = smul.u32 %s268, 2
        $region44: #{tpu_custom_call.1} parent=35 // pred_fallthru
          _
      $region36: #{tpu_custom_call.1} parent=5 // pred_fallthru
        _
      %p270 = scmp.le.s32.totalorder 1, %s16
      %p271 = scmp.lt.s32.totalorder %s16, 3
      %p272 = pnand %p270, %p271
      %p273 = pneg %p272
      // Predicated region
      $region45: #{tpu_custom_call.1} parent=5 // pred_check
        _
      $region46: #{tpu_custom_call.1} parent=5 // pred_check_branch
        %275 = sbr.rel (%p272) target = $region48
      $region47: #{tpu_custom_call.1} parent=5 // pred_region
        %s276 = ssub.s32 %s16, 1
        %s277 = smul.u32 2, %s21
        %s278 = ssub.s32 3, %s277
        %p279 = scmp.lt.s32.totalorder %s278, 2
        %s280 = scalar_select %p279, %s278, 2
        %s281 = smul.u32 8, %s280
        %p282 = scmp.lt.s32.totalorder %s277, 2
        %s283 = scalar_select %p282, %s277, 2
        %s284 = smul.addr %s283, 8
        %s285 = scalar_lea.vmem %s0, %s284
        %p286 = pneg %p42
        %p287 = pneg %p39
        %s288 = smul.u32 2, %s21
        %s289 = ssub.s32 3, %s288
        %p290 = scmp.lt.s32.totalorder %s289, 2
        %s291 = scalar_select %p290, %s289, 2
        %s292 = smul.u32 8, %s291
        %s293 = smul.u32 %s292, 2
        %p294 = scmp.lt.s32.totalorder %s288, 2
        %s295 = scalar_select %p294, %s288, 2
        %s296 = smul.addr %s295, 2
        %s297 = smul.addr %s296, 8
        %s298 = scalar_lea.vmem %s1, %s297
        %p299 = pneg %p68
        %p300 = pneg %p65
        %p301 = pneg %p89
        %p302 = pneg %p86
        %p303 = pneg %p110
        %p304 = pneg %p107
        %p305 = pneg %p131
        %p306 = pneg %p128
        %p307 = pneg %p152
        %p308 = pneg %p149
        %p309 = pneg %p173
        %p310 = pneg %p170
        %p311 = pneg %p199
        %p312 = pneg %p196
        %s313 = sand.u32 %s186, 1
        %s314 = scalar_lea.sflag [#allocation3], %s313
        %s315 = sand.u32 %s186, 1
        %s316 = smul.addr %s315, 8
        %s317 = scalar_lea.vmem [#allocation2], %s316
        %s318 = smul.u32 2, %s21
        %s319 = ssub.s32 3, %s318
        %p320 = scmp.lt.s32.totalorder %s319, 2
        %s321 = scalar_select %p320, %s319, 2
        %s322 = smul.u32 8, %s321
        %p323 = scmp.lt.s32.totalorder %s318, 2
        %s324 = scalar_select %p323, %s318, 2
        %s325 = smul.addr %s324, 8
        %s326 = scalar_lea.vmem %s0, %s325
        %s327 = smul.u32 2, %s21
        %s328 = ssub.s32 3, %s327
        %p329 = scmp.lt.s32.totalorder %s328, 2
        %s330 = scalar_select %p329, %s328, 2
        %s331 = smul.u32 8, %s330
        %s332 = smul.u32 2, %s21
        %s333 = ssub.s32 3, %s332
        %p334 = scmp.lt.s32.totalorder %s333, 2
        %s335 = scalar_select %p334, %s333, 2
        %s336 = smul.u32 8, %s335
        %s337 = smul.u32 %s336, 2
        %p338 = scmp.lt.s32.totalorder %s332, 2
        %s339 = scalar_select %p338, %s332, 2
        %s340 = smul.addr %s339, 2
        %s341 = smul.addr %s340, 8
        %s342 = scalar_lea.vmem %s1, %s341
        %s343 = smul.u32 2, %s21
        %s344 = ssub.s32 3, %s343
        %p345 = scmp.lt.s32.totalorder %s344, 2
        %s346 = scalar_select %p345, %s344, 2
        %s347 = smul.u32 8, %s346
        %s348 = smul.u32 %s347, 2
        %s349 = smul.u32 2, %s21
        %s350 = ssub.s32 3, %s349
        %p351 = scmp.lt.s32.totalorder %s350, 2
        %s352 = scalar_select %p351, %s350, 2
        %s353 = smul.u32 4, %s352
        %v355 = vld [vmem:[%s326] sm:$0xff]
        %v356 = vld [vmem:[%s326 + $0x8] sm:$0xff]
        %v357 = vpack.c.bf16 %v356, %v355
        %v358 = vld [vmem:[%s342] sm:$0xff]
        %v359 = vld [vmem:[%s342 + $0x8] sm:$0xff]
        %v360 = vld [vmem:[%s342 + $0x10] sm:$0xff]
        %v361 = vld [vmem:[%s342 + $0x18] sm:$0xff]
        %v362 = vpack.c.bf16 %v360, %v358
        %v363 = vpack.c.bf16 %v361, %v359
        %v364 = vld [vmem:[%s2] sm:$0xf]
        %v365 = vld [vmem:[%s2 + $0x4] sm:$0xf]
        %v366 = vld [vmem:[%s3] sm:$0xf]
        %v367 = vld [vmem:[%s3 + $0x4] sm:$0xf]
        %v368 = vld [vmem:[%s3 + $0x8] sm:$0xf]
        %v369 = vld [vmem:[%s3 + $0xc] sm:$0xf]
        %v370 = vld [vmem:[%s3 + $0x10] sm:$0xf]
        %v371 = vld [vmem:[%s3 + $0x14] sm:$0xf]
        %v372 = vld [vmem:[%s3 + $0x18] sm:$0xf]
        %v373 = vld [vmem:[%s3 + $0x1c] sm:$0xf]
        %v374 = vld [vmem:[%s3 + $0x20] sm:$0xf]
        %v375 = vld [vmem:[%s3 + $0x24] sm:$0xf]
        %v376 = vld [vmem:[%s3 + $0x28] sm:$0xf]
        %v377 = vld [vmem:[%s3 + $0x2c] sm:$0xf]
        %v378 = vld [vmem:[%s3 + $0x30] sm:$0xf]
        %v379 = vld [vmem:[%s3 + $0x34] sm:$0xf]
        %v380 = vld [vmem:[%s3 + $0x38] sm:$0xf]
        %v381 = vld [vmem:[%s3 + $0x3c] sm:$0xf]
        %v382 = vld [vmem:[%s3 + $0x40] sm:$0xf]
        %v383 = vld [vmem:[%s3 + $0x44] sm:$0xf]
        %v384 = vld [vmem:[%s3 + $0x48] sm:$0xf]
        %v385 = vld [vmem:[%s3 + $0x4c] sm:$0xf]
        %v386 = vld [vmem:[%s3 + $0x50] sm:$0xf]
        %v387 = vld [vmem:[%s3 + $0x54] sm:$0xf]
        %v388 = vld [vmem:[%s3 + $0x58] sm:$0xf]
        %v389 = vld [vmem:[%s3 + $0x5c] sm:$0xf]
        %v390 = vld [vmem:[%s3 + $0x60] sm:$0xf]
        %v391 = vld [vmem:[%s3 + $0x64] sm:$0xf]
        %v392 = vld [vmem:[%s3 + $0x68] sm:$0xf]
        %v393 = vld [vmem:[%s3 + $0x6c] sm:$0xf]
        %v394 = vld [vmem:[%s3 + $0x70] sm:$0xf]
        %v395 = vld [vmem:[%s3 + $0x74] sm:$0xf]
        %v396 = vld [vmem:[%s3 + $0x78] sm:$0xf]
        %v397 = vld [vmem:[%s3 + $0x7c] sm:$0xf]
        %v430 = vunpack.c.l.b16 %v366
        %v431 = vunpack.c.l.b16 %v367
        %v432 = vunpack.c.l.b16 %v368
        %v433 = vunpack.c.l.b16 %v369
        %v434 = vunpack.c.l.b16 %v370
        %v435 = vunpack.c.l.b16 %v371
        %v436 = vunpack.c.l.b16 %v372
        %v437 = vunpack.c.l.b16 %v373
        %v438 = vunpack.c.l.b16 %v374
        %v439 = vunpack.c.l.b16 %v375
        %v440 = vunpack.c.l.b16 %v376
        %v441 = vunpack.c.l.b16 %v377
        %v442 = vunpack.c.l.b16 %v378
        %v443 = vunpack.c.l.b16 %v379
        %v444 = vunpack.c.l.b16 %v380
        %v445 = vunpack.c.l.b16 %v381
        %v446 = vunpack.c.l.b16 %v382
        %v447 = vunpack.c.l.b16 %v383
        %v448 = vunpack.c.l.b16 %v384
        %v449 = vunpack.c.l.b16 %v385
        %v450 = vunpack.c.l.b16 %v386
        %v451 = vunpack.c.l.b16 %v387
        %v452 = vunpack.c.l.b16 %v388
        %v453 = vunpack.c.l.b16 %v389
        %v454 = vunpack.c.l.b16 %v390
        %v455 = vunpack.c.l.b16 %v391
        %v456 = vunpack.c.l.b16 %v392
        %v457 = vunpack.c.l.b16 %v393
        %v458 = vunpack.c.l.b16 %v394
        %v459 = vunpack.c.l.b16 %v395
        %v460 = vunpack.c.l.b16 %v396
        %v461 = vunpack.c.l.b16 %v397
        %v462 = vpack.c.b16 %v431, %v430
        %v463 = vpack.c.b16 %v433, %v432
        %v464 = vpack.c.b16 %v435, %v434
        %v465 = vpack.c.b16 %v437, %v436
        %v466 = vpack.c.b16 %v439, %v438
        %v467 = vpack.c.b16 %v441, %v440
        %v468 = vpack.c.b16 %v443, %v442
        %v469 = vpack.c.b16 %v445, %v444
        %v470 = vpack.c.b16 %v447, %v446
        %v471 = vpack.c.b16 %v449, %v448
        %v472 = vpack.c.b16 %v451, %v450
        %v473 = vpack.c.b16 %v453, %v452
        %v474 = vpack.c.b16 %v455, %v454
        %v475 = vpack.c.b16 %v457, %v456
        %v476 = vpack.c.b16 %v459, %v458
        %v477 = vpack.c.b16 %v461, %v460
        %494 = vmatpush.bf16.msra.mxu0 %v469
        %495 = vmatpush.bf16.msra.mxu0 %v468
        %496 = vmatpush.bf16.msra.mxu0 %v467
        %497 = vmatpush.bf16.msra.mxu0 %v466
        %498 = vmatpush.bf16.msra.mxu0 %v465
        %499 = vmatpush.bf16.msra.mxu0 %v464
        %500 = vmatpush.bf16.msra.mxu0 %v463
        %501 = vmatpush.bf16.msra.mxu0 %v462
        %502 = vmatmul.bf16.gmra.mxu0 %v362
        %v503 = vpop.f32.mrf.mxu0
        %v504 = vadd.f32 0.0, %v503
        %v505 = vpop.f32.mrf.mxu0
        %v506 = vadd.f32 0.0, %v505
        %507 = vdwg.mxu0
        %508 = vmatpush.bf16.msra.mxu0 %v477
        %509 = vmatpush.bf16.msra.mxu0 %v476
        %510 = vmatpush.bf16.msra.mxu0 %v475
        %511 = vmatpush.bf16.msra.mxu0 %v474
        %512 = vmatpush.bf16.msra.mxu0 %v473
        %513 = vmatpush.bf16.msra.mxu0 %v472
        %514 = vmatpush.bf16.msra.mxu0 %v471
        %515 = vmatpush.bf16.msra.mxu0 %v470
        %516 = vmatmul.bf16.gmra.mxu0 %v363
        %v517 = vpop.f32.mrf.mxu0
        %v518 = vadd.f32 %v504, %v517
        %v519 = vpop.f32.mrf.mxu0
        %v520 = vadd.f32 %v506, %v519
        %521 = vdwg.mxu0
        %v524 = vunpack.c.l.b16 %v364
        %v525 = vunpack.c.l.b16 %v365
        %v526 = vpack.c.b16 %v525, %v524
        %vm528 = vcmask 130048
        %v530 = vsel %vm528, %v357, 0
        %532 = vmatpush.bf16.msra.mxu0 0
        %533 = vmatpush.bf16.msra.mxu0 0
        %534 = vmatpush.bf16.msra.mxu0 0
        %535 = vmatpush.bf16.msra.mxu0 0
        %536 = vmatpush.bf16.msra.mxu0 0
        %537 = vmatpush.bf16.msra.mxu0 0
        %538 = vmatpush.bf16.msra.mxu0 0
        %539 = vmatpush.bf16.msra.mxu0 %v526
        %540 = vmatmul.bf16.gmra.mxu0 %v530
        %v541 = vpop.f32.mrf.mxu0
        %v542 = vadd.f32 %v518, %v541
        %v543 = vpop.f32.mrf.mxu0
        %v544 = vadd.f32 %v520, %v543
        %545 = vdwg.mxu0
        %v546 = vld [vmem:[%s4] sm:$0x1]
        %v548 = vperm.slane %v546, 0
        %v550 = vadd.f32 %v542, %v548
        %v551 = vadd.f32 %v544, %v548
        %vm552 = vcmp.gt.f32.partialorder %v550, 0.0
        %vm553 = vcmp.gt.f32.partialorder %v551, 0.0
        %v554 = vmul.f32 %v550, 0.01
        %v555 = vmul.f32 %v551, 0.01
        %v556 = vsel %vm552, %v550, %v554
        %v557 = vsel %vm553, %v551, %v555
        %v558 = vpack.c.bf16 %v557, %v556
        %v559 = vld [vmem:[%s5] sm:$0xf]
        %v560 = vld [vmem:[%s5 + $0x4] sm:$0xf]
        %v561 = vld [vmem:[%s5 + $0x8] sm:$0xf]
        %v562 = vld [vmem:[%s5 + $0xc] sm:$0xf]
        %v563 = vld [vmem:[%s5 + $0x10] sm:$0xf]
        %v564 = vld [vmem:[%s5 + $0x14] sm:$0xf]
        %v565 = vld [vmem:[%s5 + $0x18] sm:$0xf]
        %v566 = vld [vmem:[%s5 + $0x1c] sm:$0xf]
        %v567 = vld [vmem:[%s6] sm:$0x1]
        %v569 = vperm.slane %v567, 0
        %v579 = vunpack.c.l.b16 %v559
        %v580 = vunpack.c.l.b16 %v560
        %v581 = vunpack.c.l.b16 %v561
        %v582 = vunpack.c.l.b16 %v562
        %v583 = vunpack.c.l.b16 %v563
        %v584 = vunpack.c.l.b16 %v564
        %v585 = vunpack.c.l.b16 %v565
        %v586 = vunpack.c.l.b16 %v566
        %v587 = vpack.c.b16 %v580, %v579
        %v588 = vpack.c.b16 %v582, %v581
        %v589 = vpack.c.b16 %v584, %v583
        %v590 = vpack.c.b16 %v586, %v585
        %vm595 = vcmask 523264
        %v597 = vsel %vm595, %v558, 0
        %599 = vmatpush.bf16.msra.mxu0 0
        %600 = vmatpush.bf16.msra.mxu0 0
        %601 = vmatpush.bf16.msra.mxu0 0
        %602 = vmatpush.bf16.msra.mxu0 0
        %603 = vmatpush.bf16.msra.mxu0 %v590
        %604 = vmatpush.bf16.msra.mxu0 %v589
        %605 = vmatpush.bf16.msra.mxu0 %v588
        %606 = vmatpush.bf16.msra.mxu0 %v587
        %607 = vmatmul.bf16.gmra.mxu0 %v597
        %v608 = vpop.f32.mrf.mxu0
        %v609 = vadd.f32 %v569, %v608
        %v610 = vpop.f32.mrf.mxu0
        %v611 = vadd.f32 %v569, %v610
        %612 = vdwg.mxu0
        %v613 = vtanh.pop %v609
        %v614 = vtanh.pop %v611
        %v615 = vpack.c.bf16 %v613, %v613
        %v616 = vpack.c.bf16 %v614, %v614
        %617 = vst [vmem:[%s317] sm:$0xf] %v615
        %618 = vst [vmem:[%s317 + $0x4] sm:$0xf] %v616
        %s619 = sand.u32 %s186, 1
        %s620 = scalar_lea.sflag [#allocation3], %s619
        %s621 = sand.u32 %s186, 1
        %s622 = smul.addr %s621, 8
        %s623 = scalar_lea.vmem [#allocation2], %s622
        // Predicated region
        $region49: #{tpu_custom_call.1} parent=47 // pred_check
          %p624 = pneg %p196
        $region50: #{tpu_custom_call.1} parent=47 // pred_check_branch
          %626 = sbr.rel (%p624) target = $region52
        $region51: #{tpu_custom_call.1} parent=47 // pred_region
          %s627 = smul.u32 2, %s21
          %s628 = ssub.s32 3, %s627
          %p629 = scmp.lt.s32.totalorder %s628, 2
          %s630 = scalar_select %p629, %s628, 2
          %s631 = smul.u32 4, %s630
          %s632 = ssub.s32 8, %s631
          %s633 = sshll.u32 %s632, 4
          %634 = vsyncadd %s620, %s633
          %p635 = scmp.ne.s32.totalorder 0, %s631
          %s636 = smul.addr %s627, 4
          %s637 = scalar_lea.hbm %s7, %s636
          %s638 = smul.u32 4, %s630
          %s639 = sshll.u32 %s623, 4
          %s640 = int_to_ptr.vmem [resolvable:$true] %s639
          %s641 = sshll.u32 %s637, 4
          %s642 = int_to_ptr.hbm [resolvable:$true] %s641
          %s643 = sshll.u32 %s638, 4
          %647 = dma.vmem_to_hbm [thread:$0]  (%p635), %s640, %s643, %s642, %s620, 64, 64, 4
        $region52: #{tpu_custom_call.1} parent=47 // pred_fallthru
          _
      $region48: #{tpu_custom_call.1} parent=5 // pred_fallthru
        _
      %p648 = scmp.le.s32.totalorder 2, %s16
      // Predicated region
      $region53: #{tpu_custom_call.1} parent=5 // pred_check
        %p649 = pneg %p648
      $region54: #{tpu_custom_call.1} parent=5 // pred_check_branch
        %651 = sbr.rel (%p649) target = $region56
      $region55: #{tpu_custom_call.1} parent=5 // pred_region
        %s652 = ssub.s32 %s16, 2
        // Predicated region
        $region57: #{tpu_custom_call.1} parent=55 // pred_check
          %p653 = pneg %p202
        $region58: #{tpu_custom_call.1} parent=55 // pred_check_branch
          %655 = sbr.rel (%p653) target = $region60
        $region59: #{tpu_custom_call.1} parent=55 // pred_region
          %s656 = sand.u32 %s187, 1
          %s657 = scalar_lea.sflag [#allocation3], %s656
          %s658 = sand.u32 %s187, 1
          %s659 = smul.addr %s658, 8
          %s660 = scalar_lea.vmem [#allocation2], %s659
          %662 = dma.done %s657, 128
        $region60: #{tpu_custom_call.1} parent=55 // pred_fallthru
          _
      $region56: #{tpu_custom_call.1} parent=5 // pred_fallthru
        _
    $region6: #{tpu_custom_call.1} parent=1 // loop_footer
      %s20 = sadd.s32 1, %s16
    $region7: #{tpu_custom_call.1} parent=1 // loop_footer_branch
      %15 = sbr.rel target = $region3
    $region8: #{tpu_custom_call.1} parent=1 // loop_exit
      _
    %663 = vsyncpa [#allocation3], 1
    %s664 = scalar_lea.sflag [#allocation3], 1
    %665 = vsyncpa %s664, 1

</llo_original>
